<compile_context>
chip_gen: v6e
topology: v6e:2x2x1
jax: 0.10.0
libtpu: 0.0.40
codegen_flags: <defaults>
</compile_context>

<pallas_src>
import math

import jax
import jax.numpy as jnp
from jax import lax
from jax.experimental import pallas as pl
from jax.experimental.pallas import tpu as pltpu


def _fuse_kernel(x_ref, w_ref, b_ref, o_ref):
    # x: (1, D) fused activations; w: (D, D) in PyTorch (out, in) layout; b: (1, D).
    # Contract x axis 1 against w axis 1 ("in")  ==  x @ w.T  (no transpose copy).
    y = lax.dot_general(
        x_ref[...], w_ref[...],
        dimension_numbers=(((1,), (1,)), ((), ())),
        preferred_element_type=jnp.float32,
    )
    y = y + b_ref[...].astype(jnp.float32)
    # LeakyReLU(0.2): for slope < 1, leaky_relu(y) == max(y, slope * y).
    o_ref[...] = jnp.maximum(y, 0.2 * y).astype(o_ref.dtype)


def _fuse_pallas(x2, weight, b2):
    d = x2.shape[1]
    vmem = pl.BlockSpec(memory_space=pltpu.MemorySpace.VMEM)
    return pl.pallas_call(
        _fuse_kernel,
        out_shape=jax.ShapeDtypeStruct((1, d), x2.dtype),
        in_specs=[vmem, vmem, vmem],
        out_specs=vmem,
    )(x2, weight, b2)


@jax.jit
def fuse_embeddings(user_embed, poi_embed, weight, bias):
    """user_embed: (Du,), poi_embed: (Dp,), weight: (D, D) [out, in], bias: (D,)."""
    du = user_embed.shape[0]
    dp = poi_embed.shape[0]
    d = du + dp
    assert weight.shape == (d, d) and bias.shape == (d,)

    # Trivial D-element concat (cheap, fused under the same jit); the D*D weight
    # is never touched outside the kernel.
    x2 = jnp.concatenate([user_embed, poi_embed], axis=0).reshape(1, d)
    b2 = bias.reshape(1, d)
    out = _fuse_pallas(x2, weight, b2)
    return out.reshape(d)


def _reference(user_embed, poi_embed, weight, bias):
    x = jnp.concatenate([user_embed, poi_embed], axis=0)
    y = x @ weight.T + bias
    return jnp.where(y >= 0, y, 0.2 * y)


if __name__ == "__main__":
    user_embed_dim = 16
    poi_embed_dim = 16
    embed_dim = user_embed_dim + poi_embed_dim

    key = jax.random.PRNGKey(0)
    k_u, k_p, k_w, k_b = jax.random.split(key, 4)

    user_embed = jax.random.normal(k_u, (user_embed_dim,), dtype=jnp.float32)
    poi_embed = jax.random.normal(k_p, (poi_embed_dim,), dtype=jnp.float32)

    # nn.Linear(embed_dim, embed_dim) init: U(-1/sqrt(in), 1/sqrt(in))
    bound = 1.0 / math.sqrt(embed_dim)
    weight = jax.random.uniform(
        k_w, (embed_dim, embed_dim), dtype=jnp.float32,
        minval=-bound, maxval=bound)
    bias = jax.random.uniform(
        k_b, (embed_dim,), dtype=jnp.float32, minval=-bound, maxval=bound)

    out = fuse_embeddings(user_embed, poi_embed, weight, bias)
    out = jax.block_until_ready(out)

    ref = _reference(user_embed, poi_embed, weight, bias)
    assert out.shape == (embed_dim,)
    assert jnp.allclose(out, ref, atol=1e-5, rtol=1e-5), "mismatch vs reference"

    print("KERNEL_OK")
</pallas_src>

<mosaic_0001>
module attributes {stable_mosaic.version = 11 : i64} {
  func.func @_fuse_kernel(%arg0: memref<1x32xf32, #tpu.memory_space<vmem>>, %arg1: memref<32x32xf32, #tpu.memory_space<vmem>>, %arg2: memref<1x32xf32, #tpu.memory_space<vmem>>, %arg3: memref<1x32xf32, #tpu.memory_space<vmem>>) attributes {dimension_semantics = [], scalar_prefetch = 0 : i64, scratch_operands = 0 : i64, tpu.core_type = #tpu.core_type<tc>} {
    %c0 = arith.constant 0 : index
    %c0_0 = arith.constant 0 : index
    %0 = vector.load %arg0[%c0, %c0_0] : memref<1x32xf32, #tpu.memory_space<vmem>>, vector<1x32xf32>
    %c0_1 = arith.constant 0 : index
    %c0_2 = arith.constant 0 : index
    %1 = vector.load %arg1[%c0_1, %c0_2] : memref<32x32xf32, #tpu.memory_space<vmem>>, vector<32x32xf32>
    %cst = arith.constant dense<0.000000e+00> : vector<1x32xf32>
    %2 = tpu.matmul %0, %1, %cst {dimension_numbers = #tpu.dot_dimension_numbers<[1], [1], [0], [0], [0, 0, 1, 0], [], []>} : vector<1x32xf32>, vector<32x32xf32>, vector<1x32xf32> -> vector<1x32xf32>
    %c0_3 = arith.constant 0 : index
    %c0_4 = arith.constant 0 : index
    %3 = vector.load %arg2[%c0_3, %c0_4] : memref<1x32xf32, #tpu.memory_space<vmem>>, vector<1x32xf32>
    %4 = arith.addf %2, %3 : vector<1x32xf32>
    %cst_5 = arith.constant 2.000000e-01 : f32
    %5 = vector.broadcast %cst_5 : f32 to vector<1x32xf32>
    %6 = arith.mulf %5, %4 : vector<1x32xf32>
    %7 = arith.maximumf %4, %6 : vector<1x32xf32>
    %c0_6 = arith.constant 0 : index
    %c0_7 = arith.constant 0 : index
    %8 = vector.load %arg3[%c0_6, %c0_7] : memref<1x32xf32, #tpu.memory_space<vmem>>, vector<1x32xf32>
    tpu.vector_store %arg3[%c0_6, %c0_7], %7 {strides = array<i32>} : memref<1x32xf32, #tpu.memory_space<vmem>>, vector<1x32xf32>,
    return
  }
}

</mosaic_0001>

<llo_original>
// kernel: fuse_embeddings.1
$region0: #{fuse_embeddings.1}
  #allocation0 [shape = 'u32[]', space=smem, size = 0x4, offset = 0x4, fixed_abs, tag = 'smem constant byte address 0x4 - core index']
  #allocation1 [shape = 'u32[144,128]{1,0:T(1,128)}', space=vmem, size = 0x12000, scoped, tag = 'internal scratch']
  %s0 = inlined_call_operand.vmem [shape: f32[1,32], index: 0, kind: input, shape index: {}]
  %s1 = inlined_call_operand.hbm [shape: f32[32,32], index: 1, kind: input, shape index: {}]
  %s2 = inlined_call_operand.vmem [shape: f32[1,32], index: 2, kind: input, shape index: {}]
  %s3 = inlined_call_operand.hbm [shape: f32[1,32], index: 3, kind: output, shape index: {}]
  %s4 = sld [smem:[#allocation0]]
  $region26: #{fuse_embeddings.1} parent=0
    _
  %s6 = ssub.s32 1, %s4
  %s7 = scalar_select 0, %s6, %s4
  $region1: #{fuse_embeddings.1} parent=0
    #allocation2 [shape = 'u8[16384]{0}', space=vmem, size = 0x4000, scoped, tag = 'input window, operand 1, single buffered']
    #allocation3 [shape = 's32[1]{0}', space=sflag, size = 0x4, scoped, tag = 'scoped memory for fuse_embeddings.1']
    #allocation4 [shape = 's32[1]{0}', space=sflag, size = 0x4, scoped, tag = 'scoped memory for fuse_embeddings.1']
    #allocation5 [shape = 'u8[512]{0}', space=vmem, size = 0x400, scoped, tag = 'output window, operand 0, single buffered']
    %8 = vsyncpa [#allocation3], 0
    %9 = vsyncpa [#allocation4], 0
    // Predicated region
    $region2: #{fuse_embeddings.1} parent=1 // pred_check
      _
    $region3: #{fuse_embeddings.1} parent=1 // pred_check_branch
      %11 = sbr.rel (0) target = $region5
    $region4: #{fuse_embeddings.1} parent=1 // pred_region
      _
    $region5: #{fuse_embeddings.1} parent=1 // pred_fallthru
      _
    // Predicated region
    $region6: #{fuse_embeddings.1} parent=1 // pred_check
      _
    $region7: #{fuse_embeddings.1} parent=1 // pred_check_branch
      %13 = sbr.rel (0) target = $region9
    $region8: #{fuse_embeddings.1} parent=1 // pred_region
      %s15 = ssub.s32 512, 512
      %16 = vsyncadd [#allocation3], %s15
      %s17 = sshll.u32 [#allocation2], 4
      %s18 = int_to_ptr.vmem [resolvable:$true] %s17
      %23 = dma.hbm_to_vmem [thread:$0]  %s1, 512, %s18, [#allocation3], 128, 128, 8
    $region9: #{fuse_embeddings.1} parent=1 // pred_fallthru
      _
    // Predicated region
    $region10: #{fuse_embeddings.1} parent=1 // pred_check
      _
    $region11: #{fuse_embeddings.1} parent=1 // pred_check_branch
      %25 = sbr.rel (0) target = $region13
    $region12: #{fuse_embeddings.1} parent=1 // pred_region
      _
    $region13: #{fuse_embeddings.1} parent=1 // pred_fallthru
      _
    // Predicated region
    $region14: #{fuse_embeddings.1} parent=1 // pred_check
      _
    $region15: #{fuse_embeddings.1} parent=1 // pred_check_branch
      %27 = sbr.rel (0) target = $region17
    $region16: #{fuse_embeddings.1} parent=1 // pred_region
      %28 = dma.done [#allocation3], 512
    $region17: #{fuse_embeddings.1} parent=1 // pred_fallthru
      _
    %v29 = vld [vmem:[%s0] sm:$0x1]
    %v30 = vld [vmem:[#allocation2] sm:$0xff]
    %v31 = vld [vmem:[#allocation2 + $0x8] sm:$0xff]
    %v32 = vld [vmem:[#allocation2 + $0x10] sm:$0xff]
    %v33 = vld [vmem:[#allocation2 + $0x18] sm:$0xff]
    %v34 = vld [vmem:[%s2] sm:$0x1]
    %vm35 = vcmask 261120
    %v37 = vsel %vm35, %v29, 0
    %v40 = vsel %vm35, %v30, 0
    %v43 = vsel %vm35, %v31, 0
    %v46 = vsel %vm35, %v32, 0
    %v49 = vsel %vm35, %v33, 0
    %51 = vmatprep.subr.mxu0 0.0
    %52 = vmatpush1.xpose.msra.mxu0 0.0
    %53 = vmatprep.subr.mxu0 0.0
    %54 = vmatpush1.xpose.msra.mxu0 0.0
    %55 = vmatprep.subr.mxu0 0.0
    %56 = vmatpush1.xpose.msra.mxu0 0.0
    %57 = vmatprep.subr.mxu0 0.0
    %58 = vmatpush1.xpose.msra.mxu0 0.0
    %59 = vmatprep.subr.mxu0 0.0
    %60 = vmatpush1.xpose.msra.mxu0 0.0
    %61 = vmatprep.subr.mxu0 0.0
    %62 = vmatpush1.xpose.msra.mxu0 0.0
    %63 = vmatprep.subr.mxu0 0.0
    %64 = vmatpush1.xpose.msra.mxu0 0.0
    %65 = vmatprep.subr.mxu0 0.0
    %66 = vmatpush1.xpose.msra.mxu0 0.0
    %67 = vmatprep.subr.mxu0 0.0
    %68 = vmatpush1.xpose.msra.mxu0 0.0
    %69 = vmatprep.subr.mxu0 0.0
    %70 = vmatpush1.xpose.msra.mxu0 0.0
    %71 = vmatprep.subr.mxu0 0.0
    %72 = vmatpush1.xpose.msra.mxu0 0.0
    %73 = vmatprep.subr.mxu0 0.0
    %74 = vmatpush1.xpose.msra.mxu0 0.0
    %75 = vmatprep.subr.mxu0 0.0
    %76 = vmatpush1.xpose.msra.mxu0 %v49
    %77 = vmatprep.subr.mxu0 0.0
    %78 = vmatpush1.xpose.msra.mxu0 %v46
    %79 = vmatprep.subr.mxu0 0.0
    %80 = vmatpush1.xpose.msra.mxu0 %v43
    %81 = vmatprep.subr.mxu0 0.0
    %82 = vmatpush1.xpose.msra.mxu0 %v40
    %83 = vmatprep.subr.mxu0 0.0
    %84 = vmatpush2.xpose.msra.mxu0 0.0
    %85 = vmatprep.subr.mxu0 0.0
    %86 = vmatpush2.xpose.msra.mxu0 0.0
    %87 = vmatprep.subr.mxu0 0.0
    %88 = vmatpush2.xpose.msra.mxu0 0.0
    %89 = vmatprep.subr.mxu0 0.0
    %90 = vmatpush2.xpose.msra.mxu0 0.0
    %91 = vmatprep.subr.mxu0 0.0
    %92 = vmatpush2.xpose.msra.mxu0 0.0
    %93 = vmatprep.subr.mxu0 0.0
    %94 = vmatpush2.xpose.msra.mxu0 0.0
    %95 = vmatprep.subr.mxu0 0.0
    %96 = vmatpush2.xpose.msra.mxu0 0.0
    %97 = vmatprep.subr.mxu0 0.0
    %98 = vmatpush2.xpose.msra.mxu0 0.0
    %99 = vmatprep.subr.mxu0 0.0
    %100 = vmatpush2.xpose.msra.mxu0 0.0
    %101 = vmatprep.subr.mxu0 0.0
    %102 = vmatpush2.xpose.msra.mxu0 0.0
    %103 = vmatprep.subr.mxu0 0.0
    %104 = vmatpush2.xpose.msra.mxu0 0.0
    %105 = vmatprep.subr.mxu0 0.0
    %106 = vmatpush2.xpose.msra.mxu0 0.0
    %107 = vmatprep.subr.mxu0 0.0
    %108 = vmatpush2.xpose.msra.mxu0 0.0
    %109 = vmatprep.subr.mxu0 0.0
    %110 = vmatpush2.xpose.msra.mxu0 0.0
    %111 = vmatprep.subr.mxu0 0.0
    %112 = vmatpush2.xpose.msra.mxu0 0.0
    %113 = vmatprep.subr.mxu0 0.0
    %114 = vmatpush2.xpose.msra.mxu0 0.0
    %115 = vmatprep.mubr.f32.mxu0 0.0
    %116 = vmatmul.mubr.f32.gmra.mxu0 %v37
    %v117 = vpop.f32.mrf.mxu0
    %v118 = vadd.f32 %v34, %v117
    %v119 = vpop.f32.mrf.mxu0
    %120 = vdwg.mxu0
    %v121 = vmul.f32 %v118, 0.2
    %v122 = vmax.f32 %v118, %v121
    %vm123 = vcmask 253952
    %124 = vst.msk [vmem:[#allocation5] sm:$0x1] %vm123, %v122
    // Predicated region
    $region18: #{fuse_embeddings.1} parent=1 // pred_check
      _
    $region19: #{fuse_embeddings.1} parent=1 // pred_check_branch
      %126 = sbr.rel (0) target = $region21
    $region20: #{fuse_embeddings.1} parent=1 // pred_region
      %s128 = ssub.s32 16, 16
      %129 = vsyncadd [#allocation4], %s128
      %s131 = sshll.u32 [#allocation5], 4
      %s132 = int_to_ptr.vmem [resolvable:$true] %s131
      %134 = dma.vmem_to_hbm [thread:$0]  %s132, 16, %s3, [#allocation4]
    $region21: #{fuse_embeddings.1} parent=1 // pred_fallthru
      _
    // Predicated region
    $region22: #{fuse_embeddings.1} parent=1 // pred_check
      _
    $region23: #{fuse_embeddings.1} parent=1 // pred_check_branch
      %136 = sbr.rel (0) target = $region25
    $region24: #{fuse_embeddings.1} parent=1 // pred_region
      %137 = dma.done [#allocation4], 16
    $region25: #{fuse_embeddings.1} parent=1 // pred_fallthru
      _
    %138 = vsyncpa [#allocation3], 1
    %139 = vsyncpa [#allocation4], 1

</llo_original>
